<compile_context>
chip_gen: v6e
topology: v6e:2x2x1
jax: 0.10.0
libtpu: 0.0.40
codegen_flags: <defaults>
</compile_context>

<pallas_src>
import functools

import numpy as np
import jax
import jax.numpy as jnp
from jax.experimental import pallas as pl
from jax.experimental.pallas import tpu as pltpu


def _round_up(x, m):
    return ((x + m - 1) // m) * m


def _vmem_capacity_bytes():
    try:
        return int(pltpu.get_tpu_info().vmem_capacity_bytes)
    except Exception:
        return 64 * 1024 * 1024  # conservative fallback (v7x per-TC VMEM)


def _pick_row_fold(h_in, w_in, sh, w_out, sel_itemsize, max_sel_bytes, max_lin):
    """Pick g | H_in: fold g input rows into one lane-row so the folded output row
    (g*sh*W_out lanes) is lane-dense, preferring the SMALLEST such g (selection FLOPs
    and the resident one-hot matrix scale linearly with g)."""
    swo = sh * w_out
    cands = []
    for g in range(1, h_in + 1):
        if h_in % g:
            continue
        lin, lout = g * w_in, g * swo
        if lin * lout * sel_itemsize > max_sel_bytes:
            continue
        cands.append(g)
    if not cands:
        return 1
    small = [g for g in cands if g * w_in <= max_lin] or cands

    def density(g):
        lout = g * swo
        return lout / _round_up(lout, 128)

    dense = [g for g in small if density(g) > 0.999]
    if dense:
        return min(dense)                       # smallest lane-dense fold
    return max(small, key=lambda g: (density(g), -g))


def _upsample_kernel(sel_ref, x_ref, o_ref, *, acc_dtype):
    # sel_ref: (LIN, LOUT) one-hot selection, resident (constant index_map, fetched once)
    # x_ref:   (rows_tile, LIN)   folded input rows
    # o_ref:   (rows_tile, LOUT)  folded output rows
    x = x_ref[...]
    sel = sel_ref[...]
    if x.dtype != sel.dtype:
        # TODO(synk): integer dtypes route through f32 selection (exact for |x| < 2**24).
        x = x.astype(sel.dtype)
    y = jnp.dot(x, sel, preferred_element_type=acc_dtype)   # one-hot lane selection on the MXU
    o_ref[...] = y.astype(o_ref.dtype)


def upsample_nearest(x, target_size, inference=False):
    """Nearest upsample of NCHW tensor `x` to spatial size (target_size[2], target_size[3])."""
    assert x.ndim == 4
    n, c, h_in, w_in = x.shape
    h_out, w_out = int(target_size[2]), int(target_size[3])
    del inference  # identical result to the training branch whenever the module is well defined

    if h_out == h_in and w_out == w_in:
        return x
    if h_out % h_in != 0:
        # TODO(synk): non-integer H scale (general F.interpolate target) not implemented.
        raise NotImplementedError("target H must be an integer multiple of input H")
    sh = h_out // h_in

    if x.dtype == jnp.bfloat16:
        compute_dtype, acc_dtype = jnp.bfloat16, jnp.bfloat16   # one-hot selection exact in bf16
    elif x.dtype == jnp.float32:
        compute_dtype, acc_dtype = jnp.float32, jnp.float32
    else:
        compute_dtype, acc_dtype = jnp.float32, jnp.float32

    isz = jnp.dtype(x.dtype).itemsize
    cd_isz = jnp.dtype(compute_dtype).itemsize
    acc_isz = jnp.dtype(acc_dtype).itemsize

    # Row fold: lane-dense output rows with the smallest selection matrix / FLOPs.
    max_lin = 256 if compute_dtype == jnp.float32 else 512      # f32 FLOPs guard (v5e MXU)
    g = _pick_row_fold(h_in, w_in, sh, w_out, cd_isz,
                       max_sel_bytes=1 << 20, max_lin=max_lin)
    hg = h_in // g
    lin = g * w_in
    lout = g * sh * w_out

    # Host-built one-hot selection (grid-invariant; DMA'd once, stays resident in VMEM).
    #   output lane q = p * w_out + j  (p in [0, g*sh), j in [0, w_out))
    #   source lane   = (p // sh) * w_in + (j * w_in) // w_out     (PyTorch 'nearest' rule)
    q = np.arange(lout, dtype=np.int64)
    p, j = q // w_out, q % w_out
    src = (p // sh) * w_in + (j * w_in) // w_out
    sel_np = np.zeros((lin, lout), dtype=np.float32)
    sel_np[src, q] = 1.0
    sel = jnp.asarray(sel_np, dtype=compute_dtype)

    # Joint (N, C, Hg) row flattening — free row-major views on both sides.
    rows_total = n * c * hg
    x2d = x.reshape(rows_total, lin)

    # --- per-generation VMEM budgeting ---------------------------------------------------
    vmem_cap = _vmem_capacity_bytes()
    vmem_limit = min(vmem_cap, max(32 * 1024 * 1024, (3 * vmem_cap) // 4))
    block_budget = vmem_limit // 2

    sel_vmem = 2 * _round_up(lin, 8) * _round_up(lout, 128) * cd_isz
    per_row = 2 * (_round_up(lin, 128) * isz + _round_up(lout, 128) * isz)  # double-buffered I/O
    per_row += _round_up(lout, 128) * acc_isz                                # matmul result staging
    if jnp.dtype(x.dtype) != jnp.dtype(compute_dtype):
        per_row += _round_up(lin, 128) * cd_isz                              # in-kernel input cast

    if rows_total <= 8:
        rows_tile = rows_total
    else:
        cap_budget = max(8, ((block_budget - sel_vmem) // max(per_row, 1)) // 8 * 8)
        cap_steps = max(8, (pl.cdiv(rows_total, 4) // 8) * 8)  # keep >=4 steps (pipeline + 2 TCs)
        rows_tile = min(cap_budget, cap_steps)

    grid = (pl.cdiv(rows_total, rows_tile),)

    kernel = functools.partial(_upsample_kernel, acc_dtype=acc_dtype)

    out2d = pl.pallas_call(
        kernel,
        out_shape=jax.ShapeDtypeStruct((rows_total, lout), x.dtype),
        grid=grid,
        in_specs=[
            pl.BlockSpec((lin, lout), lambda i: (0, 0)),        # resident one-hot, fetched once
            pl.BlockSpec((rows_tile, lin), lambda i: (i, 0)),
        ],
        out_specs=pl.BlockSpec((rows_tile, lout), lambda i: (i, 0)),
        compiler_params=pltpu.CompilerParams(
            dimension_semantics=("parallel",),
            vmem_limit_bytes=int(vmem_limit),
        ),
        cost_estimate=pl.CostEstimate(
            flops=2 * rows_total * lin * lout,
            transcendentals=0,
            bytes_accessed=x.size * isz + rows_total * lout * isz + lin * lout * cd_isz,
        ),
    )(sel, x2d)

    return out2d.reshape(n, c, h_out, w_out)     # free row-major view back to NCHW


if __name__ == "__main__":
    key = jax.random.PRNGKey(0)
    N, C, H, W = 2, 4, 16, 16
    x = jax.random.normal(key, (N, C, H, W), dtype=jnp.float32)
    target_size = (N, C, 32, 32)     # 2x nearest upsample, like the training branch

    out = jax.block_until_ready(upsample_nearest(x, target_size, inference=False))

    # Reference (pure JAX): nearest upsample with integer scale == repeat along H and W.
    ref = jnp.repeat(jnp.repeat(x, target_size[2] // H, axis=2), target_size[3] // W, axis=3)
    assert out.shape == (N, C, target_size[2], target_size[3])
    assert out.dtype == x.dtype
    assert jnp.array_equal(out, ref)

    print("KERNEL_OK")
</pallas_src>

<mosaic_0001>
module attributes {stable_mosaic.version = 11 : i64} {
  func.func @_upsample_kernel(%arg0: i32, %arg1: memref<32x128xf32, #tpu.memory_space<vmem>>, %arg2: memref<16x32xf32, #tpu.memory_space<vmem>>, %arg3: memref<16x128xf32, #tpu.memory_space<vmem>>) attributes {dimension_semantics = [#tpu.dimension_semantics<parallel>], iteration_bounds = array<i64: 4>, scalar_prefetch = 0 : i64, scratch_operands = 0 : i64, tpu.core_type = #tpu.core_type<tc>, window_params = [{pipeline_mode = #tpu.pipeline_mode<synchronous>, transform_indices = @transform_0, window_bounds = array<i64: 32, 128>}, {transform_indices = @transform_1, window_bounds = array<i64: 16, 32>}, {transform_indices = @transform_2, window_bounds = array<i64: 16, 128>}]} {
    %c0 = arith.constant 0 : index
    %c0_0 = arith.constant 0 : index
    %0 = vector.load %arg2[%c0, %c0_0] : memref<16x32xf32, #tpu.memory_space<vmem>>, vector<16x32xf32>
    %c0_1 = arith.constant 0 : index
    %c0_2 = arith.constant 0 : index
    %1 = vector.load %arg1[%c0_1, %c0_2] : memref<32x128xf32, #tpu.memory_space<vmem>>, vector<32x128xf32>
    %cst = arith.constant dense<0.000000e+00> : vector<16x128xf32>
    %2 = tpu.matmul %0, %1, %cst {dimension_numbers = #tpu.dot_dimension_numbers<[1], [0], [0], [1], [0, 0, 1, 1], [], []>} : vector<16x32xf32>, vector<32x128xf32>, vector<16x128xf32> -> vector<16x128xf32>
    %c0_3 = arith.constant 0 : index
    %c0_4 = arith.constant 0 : index
    %3 = vector.load %arg3[%c0_3, %c0_4] : memref<16x128xf32, #tpu.memory_space<vmem>>, vector<16x128xf32>
    tpu.vector_store %arg3[%c0_3, %c0_4], %2 {strides = array<i32>} : memref<16x128xf32, #tpu.memory_space<vmem>>, vector<16x128xf32>,
    return
  }
  func.func @transform_0(%arg0: i32) -> (i32, i32) {
    %c0_i32 = arith.constant 0 : i32
    %c0_i32_0 = arith.constant 0 : i32
    %c0_i32_1 = arith.constant 0 : i32
    return %c0_i32, %c0_i32_0 : i32, i32
  }
  func.func @transform_1(%arg0: i32) -> (i32, i32) {
    %c0_i32 = arith.constant 0 : i32
    %c0_i32_0 = arith.constant 0 : i32
    return %arg0, %c0_i32 : i32, i32
  }
  func.func @transform_2(%arg0: i32) -> (i32, i32) {
    %c0_i32 = arith.constant 0 : i32
    %c0_i32_0 = arith.constant 0 : i32
    return %arg0, %c0_i32 : i32, i32
  }
}

</mosaic_0001>

<llo_original>
// kernel: tpu_custom_call.1
$region0: #{tpu_custom_call.1}
  #allocation0 [shape = 'u32[]', space=smem, size = 0x4, offset = 0x4, fixed_abs, tag = 'smem constant byte address 0x4 - core index']
  #allocation1 [shape = 'u32[144,128]{1,0:T(1,128)}', space=vmem, size = 0x12000, scoped, tag = 'internal scratch']
  %s0 = inlined_call_operand.vmem [shape: f32[32,128], index: 0, kind: input, shape index: {}]
  %s1 = inlined_call_operand.vmem [shape: f32[64,32], index: 1, kind: input, shape index: {}]
  %s2 = inlined_call_operand.hbm [shape: f32[64,128], index: 2, kind: output, shape index: {}]
  %s3 = sld [smem:[#allocation0]]
  $region41: #{tpu_custom_call.1} parent=0
    _
  %s5 = ssub.s32 1, %s3
  %s6 = scalar_select 0, %s5, %s3
  $region1: #{tpu_custom_call.1} parent=0
    #allocation2 [shape = 'u8[16384]{0}', space=vmem, size = 0x4000, scoped, tag = 'output window, operand 0']
    #allocation3 [shape = 's32[2]{0}', space=sflag, size = 0x8, scoped, tag = 'scoped memory for tpu_custom_call.1']
    %7 = vsyncpa [#allocation3], 0
    %s8 = scalar_lea.sflag [#allocation3], 1
    %9 = vsyncpa %s8, 0
    loop: start=0, step=1, limit=6
    $region2: #{tpu_custom_call.1} parent=1 // loop_pre_header
      _
    $region3: #{tpu_custom_call.1} parent=1 // loop_header
      %s11 = sphi 0, %s15
      %p12 = scmp.ge.s32.totalorder %s11, 6
      %s19 = sphi 0, %s19
      %s21 = sphi 0, %s19
      %s22 = sphi 0, %s21
      %s36 = sphi 0, %s22
      %s42 = sphi 0, %s44
      %s45 = sphi 0, %s42
      %s46 = sphi 0, %s45
      %s62 = sphi 0, %s46
      %s68 = sphi 0, %s70
      %s71 = sphi 0, %s68
      %s72 = sphi 0, %s71
      %s88 = sphi 0, %s72
    $region4: #{tpu_custom_call.1} parent=1 // loop_header_branch
      %14 = sbr.rel (%p12) target = $region8
    $region5: #{tpu_custom_call.1} parent=1 // loop_body
      %s16 = ssub.s32 %s11, 1
      %s17 = ssub.s32 %s11, 2
      %s18 = sadd.s32 %s11, 1
      %s20 = sadd.s32 %s19, 1
      %p23 = scmp.eq.s32.totalorder %s11, 3
      %p24 = scmp.ne.s32.totalorder %s19, %s21
      %p25 = scmp.eq.s32.totalorder %s11, 0
      %p26 = por %p24, %p25
      %p27 = scmp.ne.s32.totalorder %s19, %s21
      %p28 = scmp.eq.s32.totalorder %s16, 3
      %p29 = por %p27, %p28
      %p30 = scmp.ne.s32.totalorder %s21, %s22
      %p31 = scmp.eq.s32.totalorder %s16, 0
      %p32 = por %p30, %p31
      %p33 = scmp.ne.s32.totalorder %s21, %s22
      %p34 = scmp.eq.s32.totalorder %s17, 3
      %p35 = por %p33, %p34
      %p37 = scmp.ne.s32.totalorder %s22, %s36
      %p38 = scmp.eq.s32.totalorder %s17, 0
      %p39 = por %p37, %p38
      %s40 = ssub.s32 %s11, %s18
      %p41 = scmp.eq.s32.totalorder %s40, 0
      %s43 = sadd.s32 %s42, 1
      %s44 = scalar_select %p41, %s42, %s43
      %p47 = pneg %p41
      %p48 = scmp.eq.s32.totalorder %s11, 3
      %p49 = por %p47, %p48
      %p50 = scmp.ne.s32.totalorder %s42, %s45
      %p51 = scmp.eq.s32.totalorder %s11, 0
      %p52 = por %p50, %p51
      %p53 = scmp.ne.s32.totalorder %s42, %s45
      %p54 = scmp.eq.s32.totalorder %s16, 3
      %p55 = por %p53, %p54
      %p56 = scmp.ne.s32.totalorder %s45, %s46
      %p57 = scmp.eq.s32.totalorder %s16, 0
      %p58 = por %p56, %p57
      %p59 = scmp.ne.s32.totalorder %s45, %s46
      %p60 = scmp.eq.s32.totalorder %s17, 3
      %p61 = por %p59, %p60
      %p63 = scmp.ne.s32.totalorder %s46, %s62
      %p64 = scmp.eq.s32.totalorder %s17, 0
      %p65 = por %p63, %p64
      %s66 = ssub.s32 %s11, %s18
      %p67 = scmp.eq.s32.totalorder %s66, 0
      %s69 = sadd.s32 %s68, 1
      %s70 = scalar_select %p67, %s68, %s69
      %p73 = pneg %p67
      %p74 = scmp.eq.s32.totalorder %s11, 3
      %p75 = por %p73, %p74
      %p76 = scmp.ne.s32.totalorder %s68, %s71
      %p77 = scmp.eq.s32.totalorder %s11, 0
      %p78 = por %p76, %p77
      %p79 = scmp.ne.s32.totalorder %s68, %s71
      %p80 = scmp.eq.s32.totalorder %s16, 3
      %p81 = por %p79, %p80
      %p82 = scmp.ne.s32.totalorder %s71, %s72
      %p83 = scmp.eq.s32.totalorder %s16, 0
      %p84 = por %p82, %p83
      %p85 = scmp.ne.s32.totalorder %s71, %s72
      %p86 = scmp.eq.s32.totalorder %s17, 3
      %p87 = por %p85, %p86
      %p89 = scmp.ne.s32.totalorder %s72, %s88
      %p90 = scmp.eq.s32.totalorder %s17, 0
      %p91 = por %p89, %p90
      %p92 = scmp.le.s32.totalorder 1, %s11
      %p93 = scmp.lt.s32.totalorder %s11, 5
      %p94 = pnand %p92, %p93
      %p95 = pneg %p94
      // Predicated region
      $region9: #{tpu_custom_call.1} parent=5 // pred_check
        _
      $region10: #{tpu_custom_call.1} parent=5 // pred_check_branch
        %97 = sbr.rel (%p94) target = $region12
      $region11: #{tpu_custom_call.1} parent=5 // pred_region
        %s98 = ssub.s32 %s11, 1
        // Predicated region
        $region13: #{tpu_custom_call.1} parent=11 // pred_check
          %p99 = pneg %p32
        $region14: #{tpu_custom_call.1} parent=11 // pred_check_branch
          %101 = sbr.rel (%p99) target = $region16
        $region15: #{tpu_custom_call.1} parent=11 // pred_region
          _
        $region16: #{tpu_custom_call.1} parent=11 // pred_fallthru
          _
      $region12: #{tpu_custom_call.1} parent=5 // pred_fallthru
        _
      %p102 = scmp.lt.s32.totalorder %s11, 4
      // Predicated region
      $region17: #{tpu_custom_call.1} parent=5 // pred_check
        %p103 = pneg %p102
      $region18: #{tpu_custom_call.1} parent=5 // pred_check_branch
        %105 = sbr.rel (%p103) target = $region20
      $region19: #{tpu_custom_call.1} parent=5 // pred_region
        // Predicated region
        $region21: #{tpu_custom_call.1} parent=19 // pred_check
          %p106 = pneg %p52
        $region22: #{tpu_custom_call.1} parent=19 // pred_check_branch
          %108 = sbr.rel (%p106) target = $region24
        $region23: #{tpu_custom_call.1} parent=19 // pred_region
          %s109 = smul.u32 2, %s11
          %p110 = scmp.lt.s32.totalorder %s109, 7
          %s111 = scalar_select %p110, %s109, 7
          %s112 = smul.addr %s111, 8
          %s113 = scalar_lea.vmem %s1, %s112
          %s114 = smul.u32 2, %s11
        $region24: #{tpu_custom_call.1} parent=19 // pred_fallthru
          _
      $region20: #{tpu_custom_call.1} parent=5 // pred_fallthru
        _
      %p115 = scmp.le.s32.totalorder 1, %s11
      %p116 = scmp.lt.s32.totalorder %s11, 5
      %p117 = pnand %p115, %p116
      %p118 = pneg %p117
      // Predicated region
      $region25: #{tpu_custom_call.1} parent=5 // pred_check
        _
      $region26: #{tpu_custom_call.1} parent=5 // pred_check_branch
        %120 = sbr.rel (%p117) target = $region28
      $region27: #{tpu_custom_call.1} parent=5 // pred_region
        %s121 = ssub.s32 %s11, 1
        %p122 = pneg %p32
        %p123 = pneg %p29
        %s124 = smul.u32 2, %s16
        %p125 = scmp.lt.s32.totalorder %s124, 7
        %s126 = scalar_select %p125, %s124, 7
        %s127 = smul.addr %s126, 8
        %s128 = scalar_lea.vmem %s1, %s127
        %p129 = pneg %p58
        %p130 = pneg %p55
        %p131 = pneg %p84
        %p132 = pneg %p81
        %s133 = sand.u32 %s71, 1
        %s134 = scalar_lea.sflag [#allocation3], %s133
        %s135 = sand.u32 %s71, 1
        %s136 = smul.addr %s135, 16
        %s137 = scalar_lea.vmem [#allocation2], %s136
        %s138 = smul.u32 2, %s16
        %p139 = scmp.lt.s32.totalorder %s138, 7
        %s140 = scalar_select %p139, %s138, 7
        %s141 = smul.addr %s140, 8
        %s142 = scalar_lea.vmem %s1, %s141
        %s143 = smul.u32 2, %s16
        %s144 = smul.u32 2, %s16
        %v145 = vld [vmem:[%s142] sm:$0xff]
        %v146 = vld [vmem:[%s142 + $0x8] sm:$0xff]
        %v147 = vld [vmem:[%s0] sm:$0xff]
        %v148 = vld [vmem:[%s0 + $0x8] sm:$0xff]
        %v149 = vld [vmem:[%s0 + $0x10] sm:$0xff]
        %v150 = vld [vmem:[%s0 + $0x18] sm:$0xff]
        %vm151 = vcmask 261120
        %v153 = vsel %vm151, %v145, 0
        %v156 = vsel %vm151, %v146, 0
        %158 = vmatprep.subr.mxu0 0.0
        %159 = vmatpush1.msra.mxu0 0.0
        %160 = vmatprep.subr.mxu0 0.0
        %161 = vmatpush1.msra.mxu0 0.0
        %162 = vmatprep.subr.mxu0 0.0
        %163 = vmatpush1.msra.mxu0 0.0
        %164 = vmatprep.subr.mxu0 0.0
        %165 = vmatpush1.msra.mxu0 0.0
        %166 = vmatprep.subr.mxu0 0.0
        %167 = vmatpush1.msra.mxu0 0.0
        %168 = vmatprep.subr.mxu0 0.0
        %169 = vmatpush1.msra.mxu0 0.0
        %170 = vmatprep.subr.mxu0 0.0
        %171 = vmatpush1.msra.mxu0 0.0
        %172 = vmatprep.subr.mxu0 0.0
        %173 = vmatpush1.msra.mxu0 0.0
        %174 = vmatprep.subr.mxu0 0.0
        %175 = vmatpush1.msra.mxu0 0.0
        %176 = vmatprep.subr.mxu0 0.0
        %177 = vmatpush1.msra.mxu0 0.0
        %178 = vmatprep.subr.mxu0 0.0
        %179 = vmatpush1.msra.mxu0 0.0
        %180 = vmatprep.subr.mxu0 0.0
        %181 = vmatpush1.msra.mxu0 0.0
        %182 = vmatprep.subr.mxu0 0.0
        %183 = vmatpush1.msra.mxu0 %v150
        %184 = vmatprep.subr.mxu0 0.0
        %185 = vmatpush1.msra.mxu0 %v149
        %186 = vmatprep.subr.mxu0 0.0
        %187 = vmatpush1.msra.mxu0 %v148
        %188 = vmatprep.subr.mxu0 0.0
        %189 = vmatpush1.msra.mxu0 %v147
        %190 = vmatprep.subr.mxu0 0.0
        %191 = vmatpush2.msra.mxu0 0.0
        %192 = vmatprep.subr.mxu0 0.0
        %193 = vmatpush2.msra.mxu0 0.0
        %194 = vmatprep.subr.mxu0 0.0
        %195 = vmatpush2.msra.mxu0 0.0
        %196 = vmatprep.subr.mxu0 0.0
        %197 = vmatpush2.msra.mxu0 0.0
        %198 = vmatprep.subr.mxu0 0.0
        %199 = vmatpush2.msra.mxu0 0.0
        %200 = vmatprep.subr.mxu0 0.0
        %201 = vmatpush2.msra.mxu0 0.0
        %202 = vmatprep.subr.mxu0 0.0
        %203 = vmatpush2.msra.mxu0 0.0
        %204 = vmatprep.subr.mxu0 0.0
        %205 = vmatpush2.msra.mxu0 0.0
        %206 = vmatprep.subr.mxu0 0.0
        %207 = vmatpush2.msra.mxu0 0.0
        %208 = vmatprep.subr.mxu0 0.0
        %209 = vmatpush2.msra.mxu0 0.0
        %210 = vmatprep.subr.mxu0 0.0
        %211 = vmatpush2.msra.mxu0 0.0
        %212 = vmatprep.subr.mxu0 0.0
        %213 = vmatpush2.msra.mxu0 0.0
        %214 = vmatprep.subr.mxu0 0.0
        %215 = vmatpush2.msra.mxu0 0.0
        %216 = vmatprep.subr.mxu0 0.0
        %217 = vmatpush2.msra.mxu0 0.0
        %218 = vmatprep.subr.mxu0 0.0
        %219 = vmatpush2.msra.mxu0 0.0
        %220 = vmatprep.subr.mxu0 0.0
        %221 = vmatpush2.msra.mxu0 0.0
        %222 = vmatprep.mubr.f32.mxu0 0.0
        %223 = vmatmul.mubr.f32.gmra.mxu0 %v153
        %v224 = vpop.f32.mrf.mxu0
        %v225 = vadd.f32 0.0, %v224
        %v226 = vpop.f32.mrf.mxu0
        %227 = vmatprep.mubr.f32.mxu0 0.0
        %228 = vmatmul.mubr.f32.gmra.mxu0 %v156
        %v229 = vpop.f32.mrf.mxu0
        %v230 = vadd.f32 0.0, %v229
        %v231 = vpop.f32.mrf.mxu0
        %232 = vdwg.mxu0
        %233 = vst [vmem:[%s137] sm:$0xff] %v225
        %234 = vst [vmem:[%s137 + $0x8] sm:$0xff] %v230
        %s235 = sand.u32 %s71, 1
        %s236 = scalar_lea.sflag [#allocation3], %s235
        %s237 = sand.u32 %s71, 1
        %s238 = smul.addr %s237, 16
        %s239 = scalar_lea.vmem [#allocation2], %s238
        // Predicated region
        $region29: #{tpu_custom_call.1} parent=27 // pred_check
          %p240 = pneg %p81
        $region30: #{tpu_custom_call.1} parent=27 // pred_check_branch
          %242 = sbr.rel (%p240) target = $region32
        $region31: #{tpu_custom_call.1} parent=27 // pred_region
          %s243 = smul.u32 2, %s16
          %s245 = ssub.s32 256, 256
          %246 = vsyncadd %s236, %s245
          %s247 = smul.addr %s243, 128
          %s248 = scalar_lea.hbm %s2, %s247
          %s249 = sshll.u32 %s239, 4
          %s250 = int_to_ptr.vmem [resolvable:$true] %s249
          %255 = dma.vmem_to_hbm [thread:$0]  %s250, 256, %s248, %s236, 128, 128, 8
        $region32: #{tpu_custom_call.1} parent=27 // pred_fallthru
          _
      $region28: #{tpu_custom_call.1} parent=5 // pred_fallthru
        _
      %p256 = scmp.le.s32.totalorder 2, %s11
      // Predicated region
      $region33: #{tpu_custom_call.1} parent=5 // pred_check
        %p257 = pneg %p256
      $region34: #{tpu_custom_call.1} parent=5 // pred_check_branch
        %259 = sbr.rel (%p257) target = $region36
      $region35: #{tpu_custom_call.1} parent=5 // pred_region
        %s260 = ssub.s32 %s11, 2
        // Predicated region
        $region37: #{tpu_custom_call.1} parent=35 // pred_check
          %p261 = pneg %p87
        $region38: #{tpu_custom_call.1} parent=35 // pred_check_branch
          %263 = sbr.rel (%p261) target = $region40
        $region39: #{tpu_custom_call.1} parent=35 // pred_region
          %s264 = sand.u32 %s72, 1
          %s265 = scalar_lea.sflag [#allocation3], %s264
          %s266 = sand.u32 %s72, 1
          %s267 = smul.addr %s266, 16
          %s268 = scalar_lea.vmem [#allocation2], %s267
          %269 = dma.done %s265, 256
        $region40: #{tpu_custom_call.1} parent=35 // pred_fallthru
          _
      $region36: #{tpu_custom_call.1} parent=5 // pred_fallthru
        _
    $region6: #{tpu_custom_call.1} parent=1 // loop_footer
      %s15 = sadd.s32 1, %s11
    $region7: #{tpu_custom_call.1} parent=1 // loop_footer_branch
      %10 = sbr.rel target = $region3
    $region8: #{tpu_custom_call.1} parent=1 // loop_exit
      _
    %270 = vsyncpa [#allocation3], 1
    %s271 = scalar_lea.sflag [#allocation3], 1
    %272 = vsyncpa %s271, 1

</llo_original>
